<compile_context>
chip_gen: v7x
topology: tpu7x:2x2x1
jax: 0.10.0
libtpu: 0.0.40
codegen_flags: <defaults>
</compile_context>

<pallas_src>
import functools

import jax
import jax.numpy as jnp
from jax import lax
from jax.experimental import pallas as pl
from jax.experimental.pallas import tpu as pltpu

LANE = 128


def _round_up(x, m):
    return ((x + m - 1) // m) * m


def _vmem_capacity_bytes():
    try:
        return int(pltpu.get_tpu_info().vmem_capacity_bytes)
    except Exception:
        return 64 * 1024 * 1024  # conservative fallback (v7x per-core VMEM)


def _pick_block(seq, cap):
    """Largest power-of-two block >= 8 that is <= cap and <= round_up(seq, 8)."""
    target = max(8, min(cap, _round_up(seq, 8)))
    t = 8
    while t * 2 <= target:
        t *= 2
    return t


def _pick_tiles(seq, d_out_pad):
    """Device-aware (tq, tk, vmem_limit_bytes) for the flash kernel."""
    vmem = _vmem_capacity_bytes()
    vmem_limit = min(100 * 1024 * 1024, int(vmem * 0.7))
    budget = int(vmem_limit * 0.75)

    big_vmem = vmem >= 100 * 1024 * 1024          # v5e / v6e (128 MiB)
    cap_q = 1024 if big_vmem else 512
    cap_k = 512

    def est(tq, tk):                               # rough flash working set
        bf, f32 = 2, 4
        vm = 2 * (tq + 2 * tk) * d_out_pad * bf    # q/k/v blocks, double-buffered
        vm += 2 * tq * d_out_pad * f32             # output block, double-buffered
        vm += tq * d_out_pad * f32 + 2 * tq * f32  # acc / m / l scratch
        vm += 4 * tq * tk * f32                    # s / p temporaries
        return vm

    tq = _pick_block(seq, cap_q)
    tk = _pick_block(seq, min(cap_k, tq))          # tk | tq (both powers of two)
    while tq > 128 and est(tq, tk) > budget:
        tq //= 2
        tk = min(tk, tq)
    while tk > 128 and est(tq, tk) > budget:
        tk //= 2
    # Give both v7x TensorCores a query block when the sequence allows it.
    if tq >= 256 and _round_up(seq, tq) // tq < 2:
        tq //= 2
        tk = min(tk, tq)
    return tq, tk, vmem_limit


def prepare_weights(wq, wk, wv):
    """One-time weight prep (call at init, not per forward): fold the
    1/sqrt(d_out) attention scale into Wq, transpose, zero-pad d_out up to a
    multiple of 128 lanes, concatenate [Wq|Wk|Wv] and cast to bf16."""
    d_out, _ = wq.shape
    d_out_pad = _round_up(d_out, LANE)
    scale = 1.0 / (float(d_out) ** 0.5)

    def pad_t(w, s):
        wt = (w.astype(jnp.float32) * s).T                        # [d_in, d_out]
        return jnp.pad(wt, ((0, 0), (0, d_out_pad - d_out)))

    w_fused = jnp.concatenate(
        [pad_t(wq, scale), pad_t(wk, 1.0), pad_t(wv, 1.0)], axis=1)
    return w_fused.astype(jnp.bfloat16), d_out


def _qkv_proj_kernel(x_ref, w_ref, q_ref, k_ref, v_ref, *, d_out_pad):
    # bf16 operands, f32 MXU accumulation; N = 3*d_out_pad keeps the MXU wide.
    proj = jnp.dot(x_ref[...], w_ref[...], preferred_element_type=jnp.float32)
    # Lane-aligned splits (d_out_pad is a multiple of 128): cheap views.
    q_ref[...] = proj[:, :d_out_pad].astype(q_ref.dtype)
    k_ref[...] = proj[:, d_out_pad:2 * d_out_pad].astype(k_ref.dtype)
    v_ref[...] = proj[:, 2 * d_out_pad:].astype(v_ref.dtype)


def _flash_attn_kernel(q_ref, k_ref, v_ref, o_ref, m_scr, l_scr, acc_scr, *,
                       kv_valid, block_k, needs_mask):
    ki = pl.program_id(1)

    @pl.when(ki == 0)
    def _init():
        m_scr[...] = jnp.full_like(m_scr, -jnp.inf)
        l_scr[...] = jnp.zeros_like(l_scr)
        acc_scr[...] = jnp.zeros_like(acc_scr)

    # scores = q @ k.T : bf16 operands, f32 accumulation, K never transposed.
    s = lax.dot_general(q_ref[...], k_ref[...], (((1,), (1,)), ((), ())),
                        preferred_element_type=jnp.float32)
    if needs_mask:  # static: compiled in only when the sequence was padded
        col = ki * block_k + lax.broadcasted_iota(jnp.int32, s.shape, 1)
        s = jnp.where(col < kv_valid, s, jnp.float32(-1e30))

    # Online softmax with f32 statistics.
    m_prev = m_scr[...]
    m_new = jnp.maximum(m_prev, jnp.max(s, axis=-1, keepdims=True))
    alpha = jnp.exp(m_prev - m_new)
    p = jnp.exp(s - m_new)
    l_scr[...] = alpha * l_scr[...] + jnp.sum(p, axis=-1, keepdims=True)
    acc_scr[...] = alpha * acc_scr[...] + jnp.dot(
        p.astype(v_ref.dtype), v_ref[...], preferred_element_type=jnp.float32)
    m_scr[...] = m_new

    @pl.when(ki == pl.num_programs(1) - 1)
    def _finalize():
        # Exact reciprocal: once per q block, negligible cost.
        o_ref[...] = (acc_scr[...] / l_scr[...]).astype(o_ref.dtype)


def self_attention_v2(x, w_fused, d_out):
    """x: [seq, d_in]; (w_fused, d_out) from prepare_weights."""
    seq, d_in = x.shape
    d_out_pad = w_fused.shape[1] // 3
    out_dtype = x.dtype

    tq, tk, vmem_limit = _pick_tiles(seq, d_out_pad)
    seq_pad = _round_up(seq, tq)          # tk | tq  =>  tk | seq_pad
    needs_mask = seq_pad > seq

    x_p = x
    if needs_mask:
        x_p = jnp.pad(x_p, ((0, seq_pad - seq), (0, 0)))
    x_p = x_p.astype(jnp.bfloat16)        # bf16 MXU operands, halved DMA bytes

    # --- 1. Fused QKV projection (once per row block; scale folded into Wq) --
    q, k, v = pl.pallas_call(
        functools.partial(_qkv_proj_kernel, d_out_pad=d_out_pad),
        out_shape=tuple(
            jax.ShapeDtypeStruct((seq_pad, d_out_pad), jnp.bfloat16)
            for _ in range(3)),
        grid_spec=pltpu.PrefetchScalarGridSpec(
            num_scalar_prefetch=0,
            grid=(seq_pad // tq,),
            in_specs=[
                pl.BlockSpec((tq, d_in), lambda i: (i, 0)),            # x rows
                # TODO(synk): single-buffer this resident weight (Buffered(1))
                # once buffer_count=1 pipeline_mode is confirmed safe here.
                pl.BlockSpec((d_in, 3 * d_out_pad), lambda i: (0, 0)),  # weights
            ],
            out_specs=[
                pl.BlockSpec((tq, d_out_pad), lambda i: (i, 0)),
                pl.BlockSpec((tq, d_out_pad), lambda i: (i, 0)),
                pl.BlockSpec((tq, d_out_pad), lambda i: (i, 0)),
            ],
        ),
        compiler_params=pltpu.CompilerParams(
            dimension_semantics=("parallel",),
            vmem_limit_bytes=vmem_limit,
        ),
    )(x_p, w_fused)

    # --- 2. Flash attention over the projected q/k/v -------------------------
    out = pl.pallas_call(
        functools.partial(_flash_attn_kernel, kv_valid=seq, block_k=tk,
                          needs_mask=needs_mask),
        out_shape=jax.ShapeDtypeStruct((seq_pad, d_out_pad), out_dtype),
        grid_spec=pltpu.PrefetchScalarGridSpec(
            num_scalar_prefetch=0,
            grid=(seq_pad // tq, seq_pad // tk),
            in_specs=[
                pl.BlockSpec((tq, d_out_pad), lambda qi, ki: (qi, 0)),  # q
                pl.BlockSpec((tk, d_out_pad), lambda qi, ki: (ki, 0)),  # k
                pl.BlockSpec((tk, d_out_pad), lambda qi, ki: (ki, 0)),  # v
            ],
            out_specs=pl.BlockSpec((tq, d_out_pad), lambda qi, ki: (qi, 0)),
            scratch_shapes=[
                pltpu.VMEM((tq, 1), jnp.float32),          # running max
                pltpu.VMEM((tq, 1), jnp.float32),          # running denominator
                pltpu.VMEM((tq, d_out_pad), jnp.float32),  # output accumulator
            ],
        ),
        compiler_params=pltpu.CompilerParams(
            dimension_semantics=("parallel", "arbitrary"),
            vmem_limit_bytes=vmem_limit,
        ),
    )(q, k, v)

    return out[:seq, :d_out]


if __name__ == "__main__":
    # Small shapes consistent with the module's forward: x is [seq, d_in].
    seq, d_in, d_out = 8, 32, 32

    key = jax.random.PRNGKey(0)
    kx, kq, kk, kv = jax.random.split(key, 4)

    x = jax.random.normal(kx, (seq, d_in), dtype=jnp.float32)

    # Deterministic init mimicking nn.Linear default (uniform +-1/sqrt(d_in)).
    # PyTorch stores weight as [d_out, d_in]; prepare_weights transposes/fuses.
    bound = 1.0 / (d_in ** 0.5)
    Wq = jax.random.uniform(kq, (d_out, d_in), jnp.float32, -bound, bound)
    Wk = jax.random.uniform(kk, (d_out, d_in), jnp.float32, -bound, bound)
    Wv = jax.random.uniform(kv, (d_out, d_in), jnp.float32, -bound, bound)

    # One-time weight prep (transpose / concat / pad / scale-fold / bf16 cast).
    w_fused, d_out_eff = prepare_weights(Wq, Wk, Wv)

    out = self_attention_v2(x, w_fused, d_out_eff)
    out = jax.block_until_ready(out)

    # Pure-JAX f32 reference of the exact PyTorch semantics.
    q_ref = x @ Wq.T
    k_ref = x @ Wk.T
    v_ref = x @ Wv.T
    s_ref = (q_ref @ k_ref.T) / (d_out ** 0.5)
    w_ref = jax.nn.softmax(s_ref, axis=-1)
    ctx_ref = w_ref @ v_ref

    assert out.shape == (seq, d_out)
    err = float(jnp.max(jnp.abs(out - ctx_ref)))
    # bf16 MXU operands (with f32 accumulation) => bf16-level tolerance.
    assert jnp.allclose(out, ctx_ref, atol=2e-2, rtol=2e-2), err

    print("KERNEL_OK")
</pallas_src>

<mosaic_0001>
module attributes {stable_mosaic.version = 11 : i64} {
  func.func @_qkv_proj_kernel(%arg0: i32, %arg1: memref<8x32xbf16, #tpu.memory_space<vmem>>, %arg2: memref<32x384xbf16, #tpu.memory_space<vmem>>, %arg3: memref<8x128xbf16, #tpu.memory_space<vmem>>, %arg4: memref<8x128xbf16, #tpu.memory_space<vmem>>, %arg5: memref<8x128xbf16, #tpu.memory_space<vmem>>) attributes {dimension_semantics = [#tpu.dimension_semantics<parallel>], iteration_bounds = array<i64: 1>, scalar_prefetch = 0 : i64, scratch_operands = 0 : i64, tpu.core_type = #tpu.core_type<tc>, window_params = [{transform_indices = @transform_0, window_bounds = array<i64: 8, 32>}, {pipeline_mode = #tpu.pipeline_mode<synchronous>, transform_indices = @transform_1, window_bounds = array<i64: 32, 384>}, {transform_indices = @transform_2, window_bounds = array<i64: 8, 128>}, {transform_indices = @transform_3, window_bounds = array<i64: 8, 128>}, {transform_indices = @transform_4, window_bounds = array<i64: 8, 128>}]} {
    %c0 = arith.constant 0 : index
    %c0_0 = arith.constant 0 : index
    %0 = vector.load %arg1[%c0, %c0_0] : memref<8x32xbf16, #tpu.memory_space<vmem>>, vector<8x32xbf16>
    %c0_1 = arith.constant 0 : index
    %c0_2 = arith.constant 0 : index
    %1 = vector.load %arg2[%c0_1, %c0_2] : memref<32x384xbf16, #tpu.memory_space<vmem>>, vector<32x384xbf16>
    %cst = arith.constant dense<0.000000e+00> : vector<8x384xf32>
    %2 = tpu.matmul %0, %1, %cst {dimension_numbers = #tpu.dot_dimension_numbers<[1], [0], [0], [1], [0, 0, 1, 1], [], []>} : vector<8x32xbf16>, vector<32x384xbf16>, vector<8x384xf32> -> vector<8x384xf32>
    %3 = vector.extract_strided_slice %2 {offsets = [0, 0], sizes = [8, 128], strides = [1, 1]} : vector<8x384xf32> to vector<8x128xf32>
    %4 = arith.truncf %3 : vector<8x128xf32> to vector<8x128xbf16>
    %c0_3 = arith.constant 0 : index
    %c0_4 = arith.constant 0 : index
    %5 = vector.load %arg3[%c0_3, %c0_4] : memref<8x128xbf16, #tpu.memory_space<vmem>>, vector<8x128xbf16>
    tpu.vector_store %arg3[%c0_3, %c0_4], %4 {strides = array<i32>} : memref<8x128xbf16, #tpu.memory_space<vmem>>, vector<8x128xbf16>,
    %6 = vector.extract_strided_slice %2 {offsets = [0, 128], sizes = [8, 128], strides = [1, 1]} : vector<8x384xf32> to vector<8x128xf32>
    %7 = arith.truncf %6 : vector<8x128xf32> to vector<8x128xbf16>
    %c0_5 = arith.constant 0 : index
    %c0_6 = arith.constant 0 : index
    %8 = vector.load %arg4[%c0_5, %c0_6] : memref<8x128xbf16, #tpu.memory_space<vmem>>, vector<8x128xbf16>
    tpu.vector_store %arg4[%c0_5, %c0_6], %7 {strides = array<i32>} : memref<8x128xbf16, #tpu.memory_space<vmem>>, vector<8x128xbf16>,
    %9 = vector.extract_strided_slice %2 {offsets = [0, 256], sizes = [8, 128], strides = [1, 1]} : vector<8x384xf32> to vector<8x128xf32>
    %10 = arith.truncf %9 : vector<8x128xf32> to vector<8x128xbf16>
    %c0_7 = arith.constant 0 : index
    %c0_8 = arith.constant 0 : index
    %11 = vector.load %arg5[%c0_7, %c0_8] : memref<8x128xbf16, #tpu.memory_space<vmem>>, vector<8x128xbf16>
    tpu.vector_store %arg5[%c0_7, %c0_8], %10 {strides = array<i32>} : memref<8x128xbf16, #tpu.memory_space<vmem>>, vector<8x128xbf16>,
    return
  }
  func.func @transform_0(%arg0: i32) -> (i32, i32) {
    %c0_i32 = arith.constant 0 : i32
    %c0_i32_0 = arith.constant 0 : i32
    return %arg0, %c0_i32 : i32, i32
  }
  func.func @transform_1(%arg0: i32) -> (i32, i32) {
    %c0_i32 = arith.constant 0 : i32
    %c0_i32_0 = arith.constant 0 : i32
    %c0_i32_1 = arith.constant 0 : i32
    return %c0_i32, %c0_i32_0 : i32, i32
  }
  func.func @transform_2(%arg0: i32) -> (i32, i32) {
    %c0_i32 = arith.constant 0 : i32
    %c0_i32_0 = arith.constant 0 : i32
    return %arg0, %c0_i32 : i32, i32
  }
  func.func @transform_3(%arg0: i32) -> (i32, i32) {
    %c0_i32 = arith.constant 0 : i32
    %c0_i32_0 = arith.constant 0 : i32
    return %arg0, %c0_i32 : i32, i32
  }
  func.func @transform_4(%arg0: i32) -> (i32, i32) {
    %c0_i32 = arith.constant 0 : i32
    %c0_i32_0 = arith.constant 0 : i32
    return %arg0, %c0_i32 : i32, i32
  }
}

</mosaic_0001>

<llo_original>
// kernel: tpu_custom_call.1
$region0: #{tpu_custom_call.1}
  #allocation0 [shape = 'u32[]', space=smem, size = 0x4, offset = 0x4, fixed_abs, tag = 'smem constant byte address 0x4 - core index']
  #allocation1 [shape = 'u32[144,128]{1,0:T(1,128)}', space=vmem, size = 0x12000, scoped, tag = 'internal scratch']
  %s0 = inlined_call_operand.hbm [shape: bf16[8,32], index: 0, kind: input, shape index: {}]
  %s1 = inlined_call_operand.hbm [shape: bf16[32,384], index: 1, kind: input, shape index: {}]
  %s2 = inlined_call_operand.hbm [shape: bf16[8,128], index: 2, kind: output, shape index: {0}]
  %s3 = inlined_call_operand.hbm [shape: bf16[8,128], index: 3, kind: output, shape index: {1}]
  %s4 = inlined_call_operand.hbm [shape: bf16[8,128], index: 4, kind: output, shape index: {2}]
  %5 = xla_tuple %s2, %s3, %s4
  %s6 = sld [smem:[#allocation0]]
  $region42: #{tpu_custom_call.1} parent=0
    _
  %s8 = ssub.s32 1, %s6
  %s9 = scalar_select 0, %s8, %s6
  $region1: #{tpu_custom_call.1} parent=0
    #allocation2 [shape = 'u8[2048]{0}', space=vmem, size = 0x800, scoped, tag = 'input window, operand 0, single buffered']
    #allocation3 [shape = 's32[1]{0}', space=sflag, size = 0x4, scoped, tag = 'scoped memory for tpu_custom_call.1']
    #allocation4 [shape = 's32[1]{0}', space=sflag, size = 0x4, scoped, tag = 'scoped memory for tpu_custom_call.1']
    #allocation5 [shape = 'u8[24576]{0}', space=vmem, size = 0x6000, scoped, tag = 'input window, operand 1, single buffered']
    #allocation6 [shape = 's32[1]{0}', space=sflag, size = 0x4, scoped, tag = 'scoped memory for tpu_custom_call.1']
    #allocation7 [shape = 'u8[2048]{0}', space=vmem, size = 0x800, scoped, tag = 'output window, operand 0, single buffered']
    #allocation8 [shape = 'u8[2048]{0}', space=vmem, size = 0x800, scoped, tag = 'output window, operand 1, single buffered']
    #allocation9 [shape = 's32[1]{0}', space=sflag, size = 0x4, scoped, tag = 'scoped memory for tpu_custom_call.1']
    #allocation10 [shape = 'u8[2048]{0}', space=vmem, size = 0x800, scoped, tag = 'output window, operand 2, single buffered']
    %10 = vsyncpa [#allocation3], 0
    %11 = vsyncpa [#allocation6], 0
    %12 = vsyncpa [#allocation4], 0
    %13 = vsyncpa [#allocation9], 0
    // Predicated region
    $region2: #{tpu_custom_call.1} parent=1 // pred_check
      _
    $region3: #{tpu_custom_call.1} parent=1 // pred_check_branch
      %15 = sbr.rel (0) target = $region5
    $region4: #{tpu_custom_call.1} parent=1 // pred_region
      %s17 = ssub.s32 64, 64
      %18 = vsyncadd [#allocation3], %s17
      %s20 = sshll.u32 [#allocation2], 4
      %s21 = int_to_ptr.vmem [resolvable:$true] %s20
      %23 = dma.hbm_to_vmem [thread:$0]  %s0, 64, %s21, [#allocation3]
    $region5: #{tpu_custom_call.1} parent=1 // pred_fallthru
      _
    // Predicated region
    $region6: #{tpu_custom_call.1} parent=1 // pred_check
      _
    $region7: #{tpu_custom_call.1} parent=1 // pred_check_branch
      %25 = sbr.rel (0) target = $region9
    $region8: #{tpu_custom_call.1} parent=1 // pred_region
      %s27 = ssub.s32 768, 768
      %28 = vsyncadd [#allocation6], %s27
      %s29 = sshll.u32 [#allocation5], 4
      %s30 = int_to_ptr.vmem [resolvable:$true] %s29
      %35 = dma.hbm_to_vmem [thread:$0]  %s1, 768, %s30, [#allocation6], 192, 192, 12
    $region9: #{tpu_custom_call.1} parent=1 // pred_fallthru
      _
    // Predicated region
    $region10: #{tpu_custom_call.1} parent=1 // pred_check
      _
    $region11: #{tpu_custom_call.1} parent=1 // pred_check_branch
      %37 = sbr.rel (0) target = $region13
    $region12: #{tpu_custom_call.1} parent=1 // pred_region
      %38 = dma.done [#allocation3], 64
    $region13: #{tpu_custom_call.1} parent=1 // pred_fallthru
      _
    // Predicated region
    $region14: #{tpu_custom_call.1} parent=1 // pred_check
      _
    $region15: #{tpu_custom_call.1} parent=1 // pred_check_branch
      %40 = sbr.rel (0) target = $region17
    $region16: #{tpu_custom_call.1} parent=1 // pred_region
      %41 = dma.done [#allocation6], 768
    $region17: #{tpu_custom_call.1} parent=1 // pred_fallthru
      _
    %v43 = vld [vmem:[#allocation2] sm:$0xf]
    %v44 = vld [vmem:[#allocation5] sm:$0xff]
    %v45 = vld [vmem:[#allocation5 + $0x8] sm:$0xf]
    %v46 = vld [vmem:[#allocation5 + $0xc] sm:$0xff]
    %v47 = vld [vmem:[#allocation5 + $0x14] sm:$0xf]
    %v48 = vld [vmem:[#allocation5 + $0x18] sm:$0xff]
    %v49 = vld [vmem:[#allocation5 + $0x20] sm:$0xf]
    %v50 = vld [vmem:[#allocation5 + $0x24] sm:$0xff]
    %v51 = vld [vmem:[#allocation5 + $0x2c] sm:$0xf]
    %v60 = vunpack.c.l.b16 %v44
    %v61 = vunpack.c.h.b16 %v44
    %v62 = vunpack.c.l.b16 %v45
    %v63 = vunpack.c.l.b16 %v46
    %v64 = vunpack.c.h.b16 %v46
    %v65 = vunpack.c.l.b16 %v47
    %v66 = vunpack.c.l.b16 %v48
    %v67 = vunpack.c.h.b16 %v48
    %v68 = vunpack.c.l.b16 %v49
    %v69 = vunpack.c.l.b16 %v50
    %v70 = vunpack.c.h.b16 %v50
    %v71 = vunpack.c.l.b16 %v51
    %v72 = vpack.c.b16 %v63, %v60
    %v73 = vpack.c.b16 %v64, %v61
    %v74 = vpack.c.b16 %v65, %v62
    %v75 = vpack.c.b16 %v69, %v66
    %v76 = vpack.c.b16 %v70, %v67
    %v77 = vpack.c.b16 %v71, %v68
    %vm84 = vcmask 261120
    %v86 = vsel %vm84, %v43, 0
    %88 = vmatprep.subr.bf16.mxu0 %v73
    %89 = vmatpush1.bf16.msra.mxu0 %v72
    %90 = vmatprep.subr.bf16.mxu0 %v76
    %91 = vmatpush1.bf16.msra.mxu0 %v75
    %92 = vmatprep.subr.bf16.mxu0 0
    %93 = vmatpush1.bf16.msra.mxu0 0
    %94 = vmatprep.subr.bf16.mxu0 0
    %95 = vmatpush1.bf16.msra.mxu0 0
    %96 = vmatprep.subr.bf16.mxu0 0
    %97 = vmatpush1.bf16.msra.mxu0 0
    %98 = vmatprep.subr.bf16.mxu0 0
    %99 = vmatpush1.bf16.msra.mxu0 0
    %100 = vmatprep.subr.bf16.mxu0 0
    %101 = vmatpush1.bf16.msra.mxu0 0
    %102 = vmatprep.subr.bf16.mxu0 0
    %103 = vmatpush1.bf16.msra.mxu0 0
    %104 = vmatprep.subr.bf16.mxu0 0
    %105 = vmatpush1.bf16.msra.mxu0 0
    %106 = vmatprep.subr.bf16.mxu0 0
    %107 = vmatpush1.bf16.msra.mxu0 0
    %108 = vmatprep.subr.bf16.mxu0 0
    %109 = vmatpush1.bf16.msra.mxu0 0
    %110 = vmatprep.subr.bf16.mxu0 0
    %111 = vmatpush1.bf16.msra.mxu0 0
    %112 = vmatprep.subr.bf16.mxu0 0
    %113 = vmatpush1.bf16.msra.mxu0 0
    %114 = vmatprep.subr.bf16.mxu0 0
    %115 = vmatpush1.bf16.msra.mxu0 0
    %116 = vmatprep.subr.bf16.mxu0 0
    %117 = vmatpush1.bf16.msra.mxu0 0
    %118 = vmatprep.subr.bf16.mxu0 0
    %119 = vmatpush1.bf16.msra.mxu0 0
    %120 = vmatprep.mubr.bf16.mxu0 0
    %121 = vmatmul.mubr.bf16.gmra.mrb[0].mxu0 %v86
    %v122 = vpop.f32.mrb[0].mxu0
    %v123 = vadd.f32 0.0, %v122
    %v124 = vpop.f32.mrb[0].mxu0
    %v125 = vadd.f32 0.0, %v124
    %v126 = vpop.f32.mrb[0].mxu0
    %v127 = vpop.f32.mrb[0].mxu0
    %128 = vdwg.mxu0
    %129 = vmatprep.subr.bf16.mxu0 0
    %130 = vmatpush1.bf16.msra.mxu0 %v74
    %131 = vmatprep.subr.bf16.mxu0 0
    %132 = vmatpush1.bf16.msra.mxu0 %v77
    %133 = vmatprep.subr.bf16.mxu0 0
    %134 = vmatpush1.bf16.msra.mxu0 0
    %135 = vmatprep.subr.bf16.mxu0 0
    %136 = vmatpush1.bf16.msra.mxu0 0
    %137 = vmatprep.subr.bf16.mxu0 0
    %138 = vmatpush1.bf16.msra.mxu0 0
    %139 = vmatprep.subr.bf16.mxu0 0
    %140 = vmatpush1.bf16.msra.mxu0 0
    %141 = vmatprep.subr.bf16.mxu0 0
    %142 = vmatpush1.bf16.msra.mxu0 0
    %143 = vmatprep.subr.bf16.mxu0 0
    %144 = vmatpush1.bf16.msra.mxu0 0
    %145 = vmatprep.subr.bf16.mxu0 0
    %146 = vmatpush1.bf16.msra.mxu0 0
    %147 = vmatprep.subr.bf16.mxu0 0
    %148 = vmatpush1.bf16.msra.mxu0 0
    %149 = vmatprep.subr.bf16.mxu0 0
    %150 = vmatpush1.bf16.msra.mxu0 0
    %151 = vmatprep.subr.bf16.mxu0 0
    %152 = vmatpush1.bf16.msra.mxu0 0
    %153 = vmatprep.subr.bf16.mxu0 0
    %154 = vmatpush1.bf16.msra.mxu0 0
    %155 = vmatprep.subr.bf16.mxu0 0
    %156 = vmatpush1.bf16.msra.mxu0 0
    %157 = vmatprep.subr.bf16.mxu0 0
    %158 = vmatpush1.bf16.msra.mxu0 0
    %159 = vmatprep.subr.bf16.mxu0 0
    %160 = vmatpush1.bf16.msra.mxu0 0
    %161 = vmatprep.mubr.bf16.mxu0 0
    %162 = vmatmul.mubr.bf16.gmra.mrb[0].mxu0 %v86
    %v163 = vpop.f32.mrb[0].mxu0
    %v164 = vadd.f32 0.0, %v163
    %v165 = vpop.f32.mrb[0].mxu0
    %v166 = vpop.f32.mrb[0].mxu0
    %v167 = vpop.f32.mrb[0].mxu0
    %168 = vdwg.mxu0
    %v169 = vpack.c.bf16 %v123, %v123
    %170 = vst [vmem:[#allocation7] sm:$0xf] %v169
    %v171 = vpack.c.bf16 %v125, %v125
    %172 = vst [vmem:[#allocation8] sm:$0xf] %v171
    %v173 = vpack.c.bf16 %v164, %v164
    %174 = vst [vmem:[#allocation10] sm:$0xf] %v173
    // Predicated region
    $region18: #{tpu_custom_call.1} parent=1 // pred_check
      _
    $region19: #{tpu_custom_call.1} parent=1 // pred_check_branch
      %176 = sbr.rel (0) target = $region21
    $region20: #{tpu_custom_call.1} parent=1 // pred_region
      %s178 = ssub.s32 64, 64
      %179 = vsyncadd [#allocation4], %s178
      %s181 = sshll.u32 [#allocation7], 4
      %s182 = int_to_ptr.vmem [resolvable:$true] %s181
      %184 = dma.vmem_to_hbm [thread:$0]  %s182, 64, %s2, [#allocation4]
    $region21: #{tpu_custom_call.1} parent=1 // pred_fallthru
      _
    // Predicated region
    $region22: #{tpu_custom_call.1} parent=1 // pred_check
      _
    $region23: #{tpu_custom_call.1} parent=1 // pred_check_branch
      %186 = sbr.rel (0) target = $region25
    $region24: #{tpu_custom_call.1} parent=1 // pred_region
      %s188 = ssub.s32 64, 64
      %189 = vsyncadd [#allocation9], %s188
      %s191 = sshll.u32 [#allocation8], 4
      %s192 = int_to_ptr.vmem [resolvable:$true] %s191
      %194 = dma.vmem_to_hbm [thread:$0]  %s192, 64, %s3, [#allocation9]
    $region25: #{tpu_custom_call.1} parent=1 // pred_fallthru
      _
    // Predicated region
    $region26: #{tpu_custom_call.1} parent=1 // pred_check
      _
    $region27: #{tpu_custom_call.1} parent=1 // pred_check_branch
      %196 = sbr.rel (0) target = $region29
    $region28: #{tpu_custom_call.1} parent=1 // pred_region
      %s198 = ssub.s32 64, 64
      %199 = vsyncadd [#allocation9], %s198
      %s201 = sshll.u32 [#allocation10], 4
      %s202 = int_to_ptr.vmem [resolvable:$true] %s201
      %204 = dma.vmem_to_hbm [thread:$0]  %s202, 64, %s4, [#allocation9]
    $region29: #{tpu_custom_call.1} parent=1 // pred_fallthru
      _
    // Predicated region
    $region30: #{tpu_custom_call.1} parent=1 // pred_check
      _
    $region31: #{tpu_custom_call.1} parent=1 // pred_check_branch
      %206 = sbr.rel (0) target = $region33
    $region32: #{tpu_custom_call.1} parent=1 // pred_region
      %207 = dma.done [#allocation4], 64
    $region33: #{tpu_custom_call.1} parent=1 // pred_fallthru
      _
    // Predicated region
    $region34: #{tpu_custom_call.1} parent=1 // pred_check
      _
    $region35: #{tpu_custom_call.1} parent=1 // pred_check_branch
      %209 = sbr.rel (0) target = $region37
    $region36: #{tpu_custom_call.1} parent=1 // pred_region
      %210 = dma.done [#allocation9], 64
    $region37: #{tpu_custom_call.1} parent=1 // pred_fallthru
      _
    // Predicated region
    $region38: #{tpu_custom_call.1} parent=1 // pred_check
      _
    $region39: #{tpu_custom_call.1} parent=1 // pred_check_branch
      %212 = sbr.rel (0) target = $region41
    $region40: #{tpu_custom_call.1} parent=1 // pred_region
      %213 = dma.done [#allocation9], 64
    $region41: #{tpu_custom_call.1} parent=1 // pred_fallthru
      _
    %214 = vsyncpa [#allocation3], 1
    %215 = vsyncpa [#allocation6], 1
    %216 = vsyncpa [#allocation4], 1
    %217 = vsyncpa [#allocation9], 1

</llo_original>
